<compile_context>
chip_gen: v7x
topology: tpu7x:2x2x1
jax: 0.10.0
libtpu: 0.0.40
codegen_flags: <defaults>
</compile_context>

<pallas_src>
import math
import functools

import jax
import jax.numpy as jnp
from jax import lax
from jax.experimental import pallas as pl
from jax.experimental.pallas import tpu as pltpu


def _time_embedding_kernel(t_ref, fp_ref, w1_ref, bias_ref, w2_ref, out_ref,
                           *, gelu_approx):
    """Fused: sinusoidal embedding + linear1 + GELU + linear2.

    t_ref    : (Bt, 1)   f32
    fp_ref   : (2, 2H)   f32   row 0: freqs tiled twice; row 1: phase (0 | pi/2)
    w1_ref   : (2H, D)   f32/bf16   (pre-transposed nn.Linear weight)
    bias_ref : (2, D)    f32   row 0: b1; row 1: b2
    w2_ref   : (D, D)    f32/bf16   (pre-transposed nn.Linear weight)
    out_ref  : (Bt, D)   f32
    """
    t = t_ref[...]                                   # (Bt, 1)
    freqs = fp_ref[0:1, :]                           # (1, 2H)
    phase = fp_ref[1:2, :]                           # (1, 2H)

    # One lane-contiguous sin slab: cos(x) == sin(x + pi/2) on the second half.
    ang = t * freqs + phase                          # (Bt, 2H)
    emb = jnp.sin(ang)

    # linear1 (cast only at the dot inputs; f32 accumulation)
    h = jnp.dot(emb.astype(w1_ref.dtype), w1_ref[...],
                preferred_element_type=jnp.float32) + bias_ref[0:1, :]

    if gelu_approx:
        # tanh-approx GELU: tanh runs on the EUP slot instead of a long VALU
        # erf polynomial (~1e-3 deviation from torch's default exact GELU).
        c = math.sqrt(2.0 / math.pi)
        h = 0.5 * h * (1.0 + jnp.tanh(c * (h + 0.044715 * (h * h * h))))
    else:
        # exact erf GELU == torch.nn.functional.gelu default
        h = 0.5 * h * (1.0 + lax.erf(h * (1.0 / math.sqrt(2.0))))

    # linear2
    out = jnp.dot(h.astype(w2_ref.dtype), w2_ref[...],
                  preferred_element_type=jnp.float32) + bias_ref[1:2, :]
    out_ref[...] = out.astype(out_ref.dtype)


def _round_up(x, m):
    return (x + m - 1) // m * m


def _choose_block_b(bp):
    """Pick a batch tile: big (amortize ~0.35us/step, hit HBM roofline) but with
    >= 2 grid steps for mid/large batches so both v7x TensorCores engage."""
    if bp <= 16:
        return bp
    half = _round_up(pl.cdiv(bp, 2), 8)
    return min(1024, half)


def prepare_time_embedding_params(w1, b1, w2, b2, embedding_dim,
                                  matmul_dtype=jnp.bfloat16):
    """One-time parameter prep (transpose / cast / freq+phase table). Call once.

    w1: (D, D//4), b1: (D,), w2: (D, D), b2: (D,) in PyTorch nn.Linear layout.
    matmul_dtype: dtype of the matmul operands (bf16 recommended on v6e/v7x;
    use jnp.float32 for exact parity with the f32 PyTorch module).
    """
    D = embedding_dim
    assert D % 8 == 0 and D >= 16, "embedding_dim must be a multiple of 8 and >= 16"
    half_dim = D // 8
    assert half_dim > 1
    two_h = 2 * half_dim
    log_scale = math.log(10000.0) / (half_dim - 1)

    k = jnp.arange(half_dim, dtype=jnp.float32)
    freqs_half = jnp.exp(k * (-log_scale))                          # (H,)
    freqs = jnp.concatenate([freqs_half, freqs_half])               # (2H,)
    phase = jnp.concatenate(
        [jnp.zeros((half_dim,), jnp.float32),
         jnp.full((half_dim,), math.pi / 2.0, jnp.float32)])        # (2H,)
    freq_phase = jnp.stack([freqs, phase], axis=0)                  # (2, 2H)

    bias = jnp.stack([b1.astype(jnp.float32),
                      b2.astype(jnp.float32)], axis=0)              # (2, D)

    return dict(
        freq_phase=freq_phase,                                      # (2, 2H)
        bias=bias,                                                  # (2, D)
        w1=jnp.transpose(w1).astype(matmul_dtype),                  # (2H, D)
        w2=jnp.transpose(w2).astype(matmul_dtype),                  # (D, D)
    )


def time_embedding(t, params, embedding_dim, block_b=None, gelu_approx=False):
    """t: (B,) float timesteps. params: output of prepare_time_embedding_params."""
    B = t.shape[0]
    D = embedding_dim
    two_h = params["w1"].shape[0]

    # Pad batch only to the f32 sublane multiple (8), never to block_b.
    Bp = _round_up(B, 8)
    if block_b is None:
        block_b = _choose_block_b(Bp)
    block_b = _round_up(min(block_b, Bp), 8)
    grid = (pl.cdiv(Bp, block_b),)   # trailing partial block is masked by Pallas

    t2 = t.reshape(B, 1).astype(jnp.float32)
    if Bp != B:
        t2 = jnp.pad(t2, ((0, Bp - B), (0, 0)))

    w_bytes = jnp.dtype(params["w1"].dtype).itemsize
    cost = pl.CostEstimate(
        flops=2 * Bp * (two_h * D + D * D),
        transcendentals=Bp * (two_h + D),          # sin slab + erf/tanh in GELU
        bytes_accessed=(4 * (Bp + 2 * two_h + 2 * D + Bp * D)
                        + w_bytes * (two_h * D + D * D)),
    )

    resident = dict(pipeline_mode=pl.Buffered(1))   # constant-index inputs

    out = pl.pallas_call(
        functools.partial(_time_embedding_kernel, gelu_approx=gelu_approx),
        out_shape=jax.ShapeDtypeStruct((Bp, D), jnp.float32),
        grid=grid,
        in_specs=[
            pl.BlockSpec((block_b, 1), lambda i: (i, 0)),            # t block
            pl.BlockSpec((2, two_h), lambda i: (0, 0), **resident),  # freqs+phase
            pl.BlockSpec((two_h, D), lambda i: (0, 0), **resident),  # w1
            pl.BlockSpec((2, D), lambda i: (0, 0), **resident),      # b1+b2
            pl.BlockSpec((D, D), lambda i: (0, 0), **resident),      # w2
        ],
        out_specs=pl.BlockSpec((block_b, D), lambda i: (i, 0)),
        compiler_params=pltpu.CompilerParams(
            dimension_semantics=("parallel",)),
        cost_estimate=cost,
    )(t2, params["freq_phase"], params["w1"], params["bias"], params["w2"])

    if Bp != B:
        out = out[:B]
    return out


def _reference(t, w1, b1, w2, b2, embedding_dim):
    """Pure-JAX reference mirroring the PyTorch forward exactly (f32)."""
    half_dim = embedding_dim // 8
    emb = math.log(10000.0) / (half_dim - 1)
    emb = jnp.exp(jnp.arange(half_dim, dtype=jnp.float32) * -emb)
    emb = t[:, None] * emb[None, :]
    emb = jnp.concatenate([jnp.sin(emb), jnp.cos(emb)], axis=1)
    emb = emb @ w1.T + b1
    emb = jax.nn.gelu(emb, approximate=False)
    emb = emb @ w2.T + b2
    return emb


if __name__ == "__main__":
    embedding_dim = 128          # D; half_dim = 16, sinusoidal dim = 32
    batch = 8

    key = jax.random.PRNGKey(0)
    k_t, k_w1, k_b1, k_w2, k_b2 = jax.random.split(key, 5)

    # Deterministic synthetic parameters (PyTorch nn.Linear shapes: (out, in)).
    in1 = embedding_dim // 4
    w1 = jax.random.uniform(k_w1, (embedding_dim, in1), jnp.float32,
                            -1.0 / math.sqrt(in1), 1.0 / math.sqrt(in1))
    b1 = jax.random.uniform(k_b1, (embedding_dim,), jnp.float32,
                            -1.0 / math.sqrt(in1), 1.0 / math.sqrt(in1))
    w2 = jax.random.uniform(k_w2, (embedding_dim, embedding_dim), jnp.float32,
                            -1.0 / math.sqrt(embedding_dim), 1.0 / math.sqrt(embedding_dim))
    b2 = jax.random.uniform(k_b2, (embedding_dim,), jnp.float32,
                            -1.0 / math.sqrt(embedding_dim), 1.0 / math.sqrt(embedding_dim))

    # Timesteps
    t = jax.random.uniform(k_t, (batch,), jnp.float32, 0.0, 1000.0)

    ref = _reference(t, w1, b1, w2, b2, embedding_dim)

    apply_fn = jax.jit(functools.partial(time_embedding,
                                         embedding_dim=embedding_dim))

    # 1) Exact-parity path: f32 matmul operands, tight tolerance.
    params_f32 = prepare_time_embedding_params(w1, b1, w2, b2, embedding_dim,
                                               matmul_dtype=jnp.float32)
    params_f32 = jax.tree.map(jax.block_until_ready, params_f32)
    out_f32 = jax.block_until_ready(apply_fn(t, params_f32))
    assert out_f32.shape == (batch, embedding_dim)
    assert jnp.allclose(out_f32, ref, atol=1e-4, rtol=1e-4)

    # 2) Performance default: bf16 matmul operands (v6e/v7x MXU-native),
    #    looser tolerance (~1e-3-level relative error from the bf16 weights).
    params_bf16 = prepare_time_embedding_params(w1, b1, w2, b2, embedding_dim)
    params_bf16 = jax.tree.map(jax.block_until_ready, params_bf16)
    out_bf16 = jax.block_until_ready(apply_fn(t, params_bf16))
    assert out_bf16.shape == (batch, embedding_dim)
    assert jnp.allclose(out_bf16, ref, atol=1e-2, rtol=1e-2)

    print("KERNEL_OK")
</pallas_src>

<mosaic_0001>
module attributes {stable_mosaic.version = 11 : i64} {
  func.func @_time_embedding_kernel(%arg0: i32, %arg1: memref<8x1xf32, #tpu.memory_space<vmem>>, %arg2: memref<2x32xf32, #tpu.memory_space<vmem>>, %arg3: memref<32x128xf32, #tpu.memory_space<vmem>>, %arg4: memref<2x128xf32, #tpu.memory_space<vmem>>, %arg5: memref<128x128xf32, #tpu.memory_space<vmem>>, %arg6: memref<8x128xf32, #tpu.memory_space<vmem>>) attributes {dimension_semantics = [#tpu.dimension_semantics<parallel>], iteration_bounds = array<i64: 1>, scalar_prefetch = 0 : i64, scratch_operands = 0 : i64, tpu.core_type = #tpu.core_type<tc>, window_params = [{transform_indices = @transform_0, window_bounds = array<i64: 8, 1>}, {pipeline_mode = #tpu.pipeline_mode<synchronous>, transform_indices = @transform_1, window_bounds = array<i64: 2, 32>}, {pipeline_mode = #tpu.pipeline_mode<synchronous>, transform_indices = @transform_2, window_bounds = array<i64: 32, 128>}, {pipeline_mode = #tpu.pipeline_mode<synchronous>, transform_indices = @transform_3, window_bounds = array<i64: 2, 128>}, {pipeline_mode = #tpu.pipeline_mode<synchronous>, transform_indices = @transform_4, window_bounds = array<i64: 128, 128>}, {transform_indices = @transform_5, window_bounds = array<i64: 8, 128>}]} {
    %c0 = arith.constant 0 : index
    %c0_0 = arith.constant 0 : index
    %0 = vector.load %arg1[%c0, %c0_0] : memref<8x1xf32, #tpu.memory_space<vmem>>, vector<8x1xf32>
    %c0_1 = arith.constant 0 : index
    %c0_2 = arith.constant 0 : index
    %1 = vector.load %arg2[%c0_1, %c0_2] : memref<2x32xf32, #tpu.memory_space<vmem>>, vector<1x32xf32>
    %c1 = arith.constant 1 : index
    %c0_3 = arith.constant 0 : index
    %2 = vector.load %arg2[%c1, %c0_3] : memref<2x32xf32, #tpu.memory_space<vmem>>, vector<1x32xf32>
    %3 = vector.broadcast %0 : vector<8x1xf32> to vector<8x32xf32>
    %4 = vector.broadcast %1 : vector<1x32xf32> to vector<8x32xf32>
    %5 = arith.mulf %3, %4 : vector<8x32xf32>
    %6 = vector.broadcast %2 : vector<1x32xf32> to vector<8x32xf32>
    %7 = arith.addf %5, %6 : vector<8x32xf32>
    %8 = math.sin %7 : vector<8x32xf32>
    %c0_4 = arith.constant 0 : index
    %c0_5 = arith.constant 0 : index
    %9 = vector.load %arg3[%c0_4, %c0_5] : memref<32x128xf32, #tpu.memory_space<vmem>>, vector<32x128xf32>
    %cst = arith.constant dense<0.000000e+00> : vector<8x128xf32>
    %10 = tpu.matmul %8, %9, %cst {dimension_numbers = #tpu.dot_dimension_numbers<[1], [0], [0], [1], [0, 0, 1, 1], [], []>} : vector<8x32xf32>, vector<32x128xf32>, vector<8x128xf32> -> vector<8x128xf32>
    %c0_6 = arith.constant 0 : index
    %c0_7 = arith.constant 0 : index
    %11 = vector.load %arg4[%c0_6, %c0_7] : memref<2x128xf32, #tpu.memory_space<vmem>>, vector<1x128xf32>
    %12 = vector.broadcast %11 : vector<1x128xf32> to vector<8x128xf32>
    %13 = arith.addf %10, %12 : vector<8x128xf32>
    %cst_8 = arith.constant 5.000000e-01 : f32
    %14 = vector.broadcast %cst_8 : f32 to vector<8x128xf32>
    %15 = arith.mulf %14, %13 : vector<8x128xf32>
    %cst_9 = arith.constant 0.707106769 : f32
    %16 = vector.broadcast %cst_9 : f32 to vector<8x128xf32>
    %17 = arith.mulf %13, %16 : vector<8x128xf32>
    %18 = math.erf %17 : vector<8x128xf32>
    %cst_10 = arith.constant 1.000000e+00 : f32
    %19 = vector.broadcast %cst_10 : f32 to vector<8x128xf32>
    %20 = arith.addf %19, %18 : vector<8x128xf32>
    %21 = arith.mulf %15, %20 : vector<8x128xf32>
    %c0_11 = arith.constant 0 : index
    %c0_12 = arith.constant 0 : index
    %22 = vector.load %arg5[%c0_11, %c0_12] : memref<128x128xf32, #tpu.memory_space<vmem>>, vector<128x128xf32>
    %cst_13 = arith.constant dense<0.000000e+00> : vector<8x128xf32>
    %23 = tpu.matmul %21, %22, %cst_13 {dimension_numbers = #tpu.dot_dimension_numbers<[1], [0], [0], [1], [0, 0, 1, 1], [], []>} : vector<8x128xf32>, vector<128x128xf32>, vector<8x128xf32> -> vector<8x128xf32>
    %c1_14 = arith.constant 1 : index
    %c0_15 = arith.constant 0 : index
    %24 = vector.load %arg4[%c1_14, %c0_15] : memref<2x128xf32, #tpu.memory_space<vmem>>, vector<1x128xf32>
    %25 = vector.broadcast %24 : vector<1x128xf32> to vector<8x128xf32>
    %26 = arith.addf %23, %25 : vector<8x128xf32>
    %c0_16 = arith.constant 0 : index
    %c0_17 = arith.constant 0 : index
    %27 = vector.load %arg6[%c0_16, %c0_17] : memref<8x128xf32, #tpu.memory_space<vmem>>, vector<8x128xf32>
    tpu.vector_store %arg6[%c0_16, %c0_17], %26 {strides = array<i32>} : memref<8x128xf32, #tpu.memory_space<vmem>>, vector<8x128xf32>,
    return
  }
  func.func @transform_0(%arg0: i32) -> (i32, i32) {
    %c0_i32 = arith.constant 0 : i32
    %c0_i32_0 = arith.constant 0 : i32
    return %arg0, %c0_i32 : i32, i32
  }
  func.func @transform_1(%arg0: i32) -> (i32, i32) {
    %c0_i32 = arith.constant 0 : i32
    %c0_i32_0 = arith.constant 0 : i32
    %c0_i32_1 = arith.constant 0 : i32
    return %c0_i32, %c0_i32_0 : i32, i32
  }
  func.func @transform_2(%arg0: i32) -> (i32, i32) {
    %c0_i32 = arith.constant 0 : i32
    %c0_i32_0 = arith.constant 0 : i32
    %c0_i32_1 = arith.constant 0 : i32
    return %c0_i32, %c0_i32_0 : i32, i32
  }
  func.func @transform_3(%arg0: i32) -> (i32, i32) {
    %c0_i32 = arith.constant 0 : i32
    %c0_i32_0 = arith.constant 0 : i32
    %c0_i32_1 = arith.constant 0 : i32
    return %c0_i32, %c0_i32_0 : i32, i32
  }
  func.func @transform_4(%arg0: i32) -> (i32, i32) {
    %c0_i32 = arith.constant 0 : i32
    %c0_i32_0 = arith.constant 0 : i32
    %c0_i32_1 = arith.constant 0 : i32
    return %c0_i32, %c0_i32_0 : i32, i32
  }
  func.func @transform_5(%arg0: i32) -> (i32, i32) {
    %c0_i32 = arith.constant 0 : i32
    %c0_i32_0 = arith.constant 0 : i32
    return %arg0, %c0_i32 : i32, i32
  }
}

</mosaic_0001>

<llo_original>
// kernel: time_embedding.1
$region0: #{time_embedding.1}
  #allocation0 [shape = 'u32[]', space=smem, size = 0x4, offset = 0x4, fixed_abs, tag = 'smem constant byte address 0x4 - core index']
  #allocation1 [shape = 'u32[144,128]{1,0:T(1,128)}', space=vmem, size = 0x12000, scoped, tag = 'internal scratch']
  %s0 = inlined_call_operand.vmem [shape: f32[8,1], index: 0, kind: input, shape index: {}]
  %s1 = inlined_call_operand.vmem [shape: f32[2,32], index: 1, kind: input, shape index: {}]
  %s2 = inlined_call_operand.hbm [shape: f32[32,128], index: 2, kind: input, shape index: {}]
  %s3 = inlined_call_operand.vmem [shape: f32[2,128], index: 3, kind: input, shape index: {}]
  %s4 = inlined_call_operand.hbm [shape: f32[128,128], index: 4, kind: input, shape index: {}]
  %s5 = inlined_call_operand.hbm [shape: f32[8,128], index: 5, kind: output, shape index: {}]
  %s6 = sld [smem:[#allocation0]]
  $region38: #{time_embedding.1} parent=0
    _
  %s8 = ssub.s32 1, %s6
  %s9 = scalar_select 0, %s8, %s6
  $region1: #{time_embedding.1} parent=0
    #allocation2 [shape = 'u8[16384]{0}', space=vmem, size = 0x4000, scoped, tag = 'input window, operand 2, single buffered']
    #allocation3 [shape = 's32[1]{0}', space=sflag, size = 0x4, scoped, tag = 'scoped memory for time_embedding.1']
    #allocation4 [shape = 's32[1]{0}', space=sflag, size = 0x4, scoped, tag = 'scoped memory for time_embedding.1']
    #allocation5 [shape = 'u8[65536]{0}', space=vmem, size = 0x10000, scoped, tag = 'input window, operand 4, single buffered']
    #allocation6 [shape = 's32[1]{0}', space=sflag, size = 0x4, scoped, tag = 'scoped memory for time_embedding.1']
    #allocation7 [shape = 'u8[4096]{0}', space=vmem, size = 0x1000, scoped, tag = 'output window, operand 0, single buffered']
    %10 = vsyncpa [#allocation3], 0
    %11 = vsyncpa [#allocation6], 0
    %12 = vsyncpa [#allocation4], 0
    // Predicated region
    $region2: #{time_embedding.1} parent=1 // pred_check
      _
    $region3: #{time_embedding.1} parent=1 // pred_check_branch
      %14 = sbr.rel (0) target = $region5
    $region4: #{time_embedding.1} parent=1 // pred_region
      _
    $region5: #{time_embedding.1} parent=1 // pred_fallthru
      _
    // Predicated region
    $region6: #{time_embedding.1} parent=1 // pred_check
      _
    $region7: #{time_embedding.1} parent=1 // pred_check_branch
      %16 = sbr.rel (0) target = $region9
    $region8: #{time_embedding.1} parent=1 // pred_region
      _
    $region9: #{time_embedding.1} parent=1 // pred_fallthru
      _
    // Predicated region
    $region10: #{time_embedding.1} parent=1 // pred_check
      _
    $region11: #{time_embedding.1} parent=1 // pred_check_branch
      %18 = sbr.rel (0) target = $region13
    $region12: #{time_embedding.1} parent=1 // pred_region
      %s20 = ssub.s32 512, 512
      %21 = vsyncadd [#allocation3], %s20
      %s22 = sshll.u32 [#allocation2], 4
      %s23 = int_to_ptr.vmem [resolvable:$true] %s22
      %28 = dma.hbm_to_vmem [thread:$0]  %s2, 512, %s23, [#allocation3], 128, 128, 8
    $region13: #{time_embedding.1} parent=1 // pred_fallthru
      _
    // Predicated region
    $region14: #{time_embedding.1} parent=1 // pred_check
      _
    $region15: #{time_embedding.1} parent=1 // pred_check_branch
      %30 = sbr.rel (0) target = $region17
    $region16: #{time_embedding.1} parent=1 // pred_region
      _
    $region17: #{time_embedding.1} parent=1 // pred_fallthru
      _
    // Predicated region
    $region18: #{time_embedding.1} parent=1 // pred_check
      _
    $region19: #{time_embedding.1} parent=1 // pred_check_branch
      %32 = sbr.rel (0) target = $region21
    $region20: #{time_embedding.1} parent=1 // pred_region
      %s34 = ssub.s32 2048, 2048
      %35 = vsyncadd [#allocation6], %s34
      %s36 = sshll.u32 [#allocation5], 4
      %s37 = int_to_ptr.vmem [resolvable:$true] %s36
      %42 = dma.hbm_to_vmem [thread:$0]  %s4, 2048, %s37, [#allocation6], 128, 128, 8
    $region21: #{time_embedding.1} parent=1 // pred_fallthru
      _
    // Predicated region
    $region22: #{time_embedding.1} parent=1 // pred_check
      _
    $region23: #{time_embedding.1} parent=1 // pred_check_branch
      %44 = sbr.rel (0) target = $region25
    $region24: #{time_embedding.1} parent=1 // pred_region
      %45 = dma.done [#allocation3], 512
    $region25: #{time_embedding.1} parent=1 // pred_fallthru
      _
    // Predicated region
    $region26: #{time_embedding.1} parent=1 // pred_check
      _
    $region27: #{time_embedding.1} parent=1 // pred_check_branch
      %47 = sbr.rel (0) target = $region29
    $region28: #{time_embedding.1} parent=1 // pred_region
      %48 = dma.done [#allocation6], 2048
    $region29: #{time_embedding.1} parent=1 // pred_fallthru
      _
    %v49 = vld [vmem:[%s0] sm:$0xff]
    %v50 = vld [vmem:[%s1] sm:$0x1]
    %v51 = vld [vmem:[%s1 + $0x1] sm:$0x1]
    %53 = vset.pattern.permute.xlu0 0
    %54 = vperm.xlu0 %53, %v49
    %v55 = vpop.permute.xlu0 %54
    %v57 = vlaneseq
    %v58 = vshrl.u32 %v57, 7
    %v59 = vsub.s32 0, %v58
    %v60 = vrot.slane %v50, %v59
    %v61 = vmul.f32 %v55, %v60
    %v62 = vlaneseq
    %v63 = vshrl.u32 %v62, 7
    %v64 = vsub.s32 0, %v63
    %v65 = vrot.slane %v51, %v64
    %v66 = vadd.f32 %v61, %v65
    %v67 = vand.u32 2147483647, %v66
    %vm68 = vcmp.le.f32.partialorder %v67, 0.7853982
    %vm69 = vcmp.lt.s32.totalorder %v66, 0
    %v70 = vand.u32 %v66, 2139095040
    %v71 = vshrl.u32 %v70, 23
    %v72 = vsub.s32 %v71, 127
    %v73 = vand.u32 2147483647, %v66
    %v74 = vand.u32 %v73, 8388607
    %v75 = vor.u32 %v74, 8388608
    %v76 = vsub.s32 0, %v75
    %v77 = vadd.s32 %v72, 1
    %vm78 = vcmp.gt.s32.totalorder %v77, 0
    %v79 = vsel %vm78, %v77, 0
    %v80 = vshrl.u32 %v79, 5
    %v81 = vand.u32 %v79, 31
    %v82 = vsub.s32 32, %v81
    %v83 = vshrl.u32 683565275, %v82
    %v84 = vshll.u32 683565275, %v81
    %v85 = vshrl.u32 2475754826, %v82
    %v86 = vor.u32 %v84, %v85
    %v87 = vshll.u32 2475754826, %v81
    %v88 = vshrl.u32 2131351028, %v82
    %v89 = vor.u32 %v87, %v88
    %v90 = vshll.u32 2131351028, %v81
    %v91 = vshrl.u32 2102212464, %v82
    %v92 = vor.u32 %v90, %v91
    %v93 = vshll.u32 2102212464, %v81
    %v94 = vshrl.u32 920167782, %v82
    %v95 = vor.u32 %v93, %v94
    %v96 = vshll.u32 920167782, %v81
    %v97 = vshrl.u32 1326507024, %v82
    %v98 = vor.u32 %v96, %v97
    %vm99 = vcmp.lt.s32.totalorder %v80, 1
    %vm100 = vcmp.lt.s32.totalorder %v80, 2
    %vm101 = vcmp.lt.s32.totalorder %v80, 3
    %vm102 = vcmp.lt.s32.totalorder %v80, 4
    %v103 = vsel %vm99, %v83, %v86
    %v104 = vsel %vm102, %v92, 2102212464
    %v105 = vsel %vm101, %v89, %v104
    %v106 = vsel %vm100, %v103, %v105
    %v107 = vsel %vm99, %v86, %v89
    %v108 = vsel %vm102, %v95, 920167782
    %v109 = vsel %vm101, %v92, %v108
    %v110 = vsel %vm100, %v107, %v109
    %v111 = vsel %vm99, %v89, %v92
    %v112 = vsel %vm102, %v98, 1326507024
    %v113 = vsel %vm101, %v95, %v112
    %v114 = vsel %vm100, %v111, %v113
    %v115 = vshll.u32 %v75, 8
    %v116 = vmul.u32.u64.compose %v115, %v114
    %v117 = vextract.low.u32 %v116
    %v118 = vextract.high.u32 %v116
    %v119 = vmul.u32.u64.compose %v115, %v110
    %v120 = vextract.low.u32 %v119
    %v121 = vextract.high.u32 %v119
    %v122 = vmul.u32 %v115, %v106
    %v123 = vadd.s32 %v118, %v120
    %vm124 = vc.u32 %v118, %v120
    %v125 = vadd.s32 %v121, 1
    %v126 = vsel %vm124, %v125, %v121
    %v127 = vadd.s32 %v122, %v126
    %v128 = vadd.s32 %v127, 536870912
    %v129 = vshrl.u32 %v128, 30
    %v130 = vshll.u32 %v129, 30
    %v131 = vsub.s32 %v127, %v130
    %vm132 = vcmp.lt.s32.totalorder %v131, 0
    %v133 = vsub.s32 0, %v131
    %v134 = vsel %vm132, %v133, %v131
    %v135 = vclz %v134
    %v136 = vsub.s32 %v135, 2
    %vm137 = vcmp.gt.s32.totalorder 0, %v136
    %v138 = vsel %vm137, 0, %v136
    %v139 = vsub.s32 32, %v138
    %v140 = vshll.u32 %v131, %v138
    %v141 = vshrl.u32 %v123, %v139
    %v142 = vor.u32 %v140, %v141
    %v143 = vsub.s32 4294967266, %v138
    %v144 = vadd.s32 %v143, 127
    %v145 = vshll.u32 %v144, 23
    %v146 = vor.u32 4788187, %v145
    %v147 = vand.u32 2147483647, %v146
    %v149 = vcvt.s32.f32 %v142
    %v150 = vmul.f32 %v149, %v147
    %v151 = vxor.u32 %v150, 2147483648
    %v152 = vsel %vm69, %v151, %v150
    %v153 = vsub.s32 4, %v129
    %v154 = vsel %vm69, %v153, %v129
    %v155 = vsel %vm68, %v66, %v152
    %v156 = vsel %vm68, 0, %v154
    %v157 = vcosq.f32.pop %v155
    %v158 = vsinq.f32.pop %v155
    %vm159 = vweird.f32 %v66
    %v160 = vadd.s32 %v156, 3
    %v161 = vand.u32 %v160, 3
    %vm162 = vcmp.lt.s32.totalorder %v161, 2
    %vm163 = vcmp.eq.s32.totalorder %v161, 0
    %v164 = vxor.u32 %v158, 2147483648
    %v165 = vsel %vm163, %v157, %v164
    %vm166 = vcmp.eq.s32.totalorder %v161, 2
    %v167 = vxor.u32 %v157, 2147483648
    %v168 = vsel %vm166, %v167, %v158
    %v169 = vsel %vm162, %v165, %v168
    %v170 = vsel %vm159, nan, %v169
    %v171 = vld [vmem:[#allocation2] sm:$0xff]
    %v172 = vld [vmem:[#allocation2 + $0x8] sm:$0xff]
    %v173 = vld [vmem:[#allocation2 + $0x10] sm:$0xff]
    %v174 = vld [vmem:[#allocation2 + $0x18] sm:$0xff]
    %v175 = vld [vmem:[%s3] sm:$0x1]
    %v176 = vlaneseq
    %v177 = vshrl.u32 %v176, 7
    %v178 = vsub.s32 0, %v177
    %v179 = vrot.slane %v175, %v178
    %vm180 = vcmask 261120
    %v182 = vsel %vm180, %v170, 0
    %184 = vmatprep.subr.mxu0 0.0
    %185 = vmatpush1.msra.mxu0 %v171
    %186 = vmatprep.subr.mxu0 0.0
    %187 = vmatpush1.msra.mxu0 %v172
    %188 = vmatprep.subr.mxu0 0.0
    %189 = vmatpush1.msra.mxu0 %v173
    %190 = vmatprep.subr.mxu0 0.0
    %191 = vmatpush1.msra.mxu0 %v174
    %192 = vmatprep.subr.mxu0 0.0
    %193 = vmatpush1.msra.mxu0 0.0
    %194 = vmatprep.subr.mxu0 0.0
    %195 = vmatpush1.msra.mxu0 0.0
    %196 = vmatprep.subr.mxu0 0.0
    %197 = vmatpush1.msra.mxu0 0.0
    %198 = vmatprep.subr.mxu0 0.0
    %199 = vmatpush1.msra.mxu0 0.0
    %200 = vmatprep.subr.mxu0 0.0
    %201 = vmatpush1.msra.mxu0 0.0
    %202 = vmatprep.subr.mxu0 0.0
    %203 = vmatpush1.msra.mxu0 0.0
    %204 = vmatprep.subr.mxu0 0.0
    %205 = vmatpush1.msra.mxu0 0.0
    %206 = vmatprep.subr.mxu0 0.0
    %207 = vmatpush1.msra.mxu0 0.0
    %208 = vmatprep.subr.mxu0 0.0
    %209 = vmatpush1.msra.mxu0 0.0
    %210 = vmatprep.subr.mxu0 0.0
    %211 = vmatpush1.msra.mxu0 0.0
    %212 = vmatprep.subr.mxu0 0.0
    %213 = vmatpush1.msra.mxu0 0.0
    %214 = vmatprep.subr.mxu0 0.0
    %215 = vmatpush1.msra.mxu0 0.0
    %216 = vmatprep.subr.mxu0 0.0
    %217 = vmatpush1.msra.mxu0 0.0
    %218 = vmatprep.subr.mxu0 0.0
    %219 = vmatpush1.msra.mxu0 0.0
    %220 = vmatprep.subr.mxu0 0.0
    %221 = vmatpush1.msra.mxu0 0.0
    %222 = vmatprep.subr.mxu0 0.0
    %223 = vmatpush1.msra.mxu0 0.0
    %224 = vmatprep.subr.mxu0 0.0
    %225 = vmatpush1.msra.mxu0 0.0
    %226 = vmatprep.subr.mxu0 0.0
    %227 = vmatpush1.msra.mxu0 0.0
    %228 = vmatprep.subr.mxu0 0.0
    %229 = vmatpush1.msra.mxu0 0.0
    %230 = vmatprep.subr.mxu0 0.0
    %231 = vmatpush1.msra.mxu0 0.0
    %232 = vmatprep.subr.mxu0 0.0
    %233 = vmatpush1.msra.mxu0 0.0
    %234 = vmatprep.subr.mxu0 0.0
    %235 = vmatpush1.msra.mxu0 0.0
    %236 = vmatprep.subr.mxu0 0.0
    %237 = vmatpush1.msra.mxu0 0.0
    %238 = vmatprep.subr.mxu0 0.0
    %239 = vmatpush1.msra.mxu0 0.0
    %240 = vmatprep.subr.mxu0 0.0
    %241 = vmatpush1.msra.mxu0 0.0
    %242 = vmatprep.subr.mxu0 0.0
    %243 = vmatpush1.msra.mxu0 0.0
    %244 = vmatprep.subr.mxu0 0.0
    %245 = vmatpush1.msra.mxu0 0.0
    %246 = vmatprep.subr.mxu0 0.0
    %247 = vmatpush1.msra.mxu0 0.0
    %248 = vmatprep.mubr.f32.mxu0 0.0
    %249 = vmatmul.mubr.f32.gmra.mrb[0].mxu0 %v182
    %v250 = vpop.f32.mrb[0].mxu0
    %v251 = vadd.f32 %v179, %v250
    %v252 = vpop.f32.mrb[0].mxu0
    %253 = vdwg.mxu0
    %v254 = vmul.f32 %v251, 0.5
    %v255 = vmul.f32 %v251, 0.70710677
    %v256 = verf.f32.pop %v255
    %v257 = vadd.f32 %v256, 1.0
    %v258 = vmul.f32 %v254, %v257
    %v259 = vld [vmem:[#allocation5] sm:$0xff]
    %v260 = vld [vmem:[#allocation5 + $0x8] sm:$0xff]
    %v261 = vld [vmem:[#allocation5 + $0x10] sm:$0xff]
    %v262 = vld [vmem:[#allocation5 + $0x18] sm:$0xff]
    %v263 = vld [vmem:[#allocation5 + $0x20] sm:$0xff]
    %v264 = vld [vmem:[#allocation5 + $0x28] sm:$0xff]
    %v265 = vld [vmem:[#allocation5 + $0x30] sm:$0xff]
    %v266 = vld [vmem:[#allocation5 + $0x38] sm:$0xff]
    %v267 = vld [vmem:[#allocation5 + $0x40] sm:$0xff]
    %v268 = vld [vmem:[#allocation5 + $0x48] sm:$0xff]
    %v269 = vld [vmem:[#allocation5 + $0x50] sm:$0xff]
    %v270 = vld [vmem:[#allocation5 + $0x58] sm:$0xff]
    %v271 = vld [vmem:[#allocation5 + $0x60] sm:$0xff]
    %v272 = vld [vmem:[#allocation5 + $0x68] sm:$0xff]
    %v273 = vld [vmem:[#allocation5 + $0x70] sm:$0xff]
    %v274 = vld [vmem:[#allocation5 + $0x78] sm:$0xff]
    %v275 = vld [vmem:[%s3 + $0x1] sm:$0x1]
    %v276 = vlaneseq
    %v277 = vshrl.u32 %v276, 7
    %v278 = vsub.s32 0, %v277
    %v279 = vrot.slane %v275, %v278
    %280 = vmatprep.subr.mxu0 0.0
    %281 = vmatpush1.msra.mxu0 %v259
    %282 = vmatprep.subr.mxu0 0.0
    %283 = vmatpush1.msra.mxu0 %v260
    %284 = vmatprep.subr.mxu0 0.0
    %285 = vmatpush1.msra.mxu0 %v261
    %286 = vmatprep.subr.mxu0 0.0
    %287 = vmatpush1.msra.mxu0 %v262
    %288 = vmatprep.subr.mxu0 0.0
    %289 = vmatpush1.msra.mxu0 %v263
    %290 = vmatprep.subr.mxu0 0.0
    %291 = vmatpush1.msra.mxu0 %v264
    %292 = vmatprep.subr.mxu0 0.0
    %293 = vmatpush1.msra.mxu0 %v265
    %294 = vmatprep.subr.mxu0 0.0
    %295 = vmatpush1.msra.mxu0 %v266
    %296 = vmatprep.subr.mxu0 0.0
    %297 = vmatpush1.msra.mxu0 %v267
    %298 = vmatprep.subr.mxu0 0.0
    %299 = vmatpush1.msra.mxu0 %v268
    %300 = vmatprep.subr.mxu0 0.0
    %301 = vmatpush1.msra.mxu0 %v269
    %302 = vmatprep.subr.mxu0 0.0
    %303 = vmatpush1.msra.mxu0 %v270
    %304 = vmatprep.subr.mxu0 0.0
    %305 = vmatpush1.msra.mxu0 %v271
    %306 = vmatprep.subr.mxu0 0.0
    %307 = vmatpush1.msra.mxu0 %v272
    %308 = vmatprep.subr.mxu0 0.0
    %309 = vmatpush1.msra.mxu0 %v273
    %310 = vmatprep.subr.mxu0 0.0
    %311 = vmatpush1.msra.mxu0 %v274
    %312 = vmatprep.subr.mxu0 0.0
    %313 = vmatpush1.msra.mxu0 0.0
    %314 = vmatprep.subr.mxu0 0.0
    %315 = vmatpush1.msra.mxu0 0.0
    %316 = vmatprep.subr.mxu0 0.0
    %317 = vmatpush1.msra.mxu0 0.0
    %318 = vmatprep.subr.mxu0 0.0
    %319 = vmatpush1.msra.mxu0 0.0
    %320 = vmatprep.subr.mxu0 0.0
    %321 = vmatpush1.msra.mxu0 0.0
    %322 = vmatprep.subr.mxu0 0.0
    %323 = vmatpush1.msra.mxu0 0.0
    %324 = vmatprep.subr.mxu0 0.0
    %325 = vmatpush1.msra.mxu0 0.0
    %326 = vmatprep.subr.mxu0 0.0
    %327 = vmatpush1.msra.mxu0 0.0
    %328 = vmatprep.subr.mxu0 0.0
    %329 = vmatpush1.msra.mxu0 0.0
    %330 = vmatprep.subr.mxu0 0.0
    %331 = vmatpush1.msra.mxu0 0.0
    %332 = vmatprep.subr.mxu0 0.0
    %333 = vmatpush1.msra.mxu0 0.0
    %334 = vmatprep.subr.mxu0 0.0
    %335 = vmatpush1.msra.mxu0 0.0
    %336 = vmatprep.subr.mxu0 0.0
    %337 = vmatpush1.msra.mxu0 0.0
    %338 = vmatprep.subr.mxu0 0.0
    %339 = vmatpush1.msra.mxu0 0.0
    %340 = vmatprep.subr.mxu0 0.0
    %341 = vmatpush1.msra.mxu0 0.0
    %342 = vmatprep.subr.mxu0 0.0
    %343 = vmatpush1.msra.mxu0 0.0
    %344 = vmatprep.mubr.f32.mxu0 0.0
    %345 = vmatmul.mubr.f32.gmra.mrb[0].mxu0 %v258
    %v346 = vpop.f32.mrb[0].mxu0
    %v347 = vadd.f32 %v279, %v346
    %v348 = vpop.f32.mrb[0].mxu0
    %349 = vdwg.mxu0
    %350 = vst [vmem:[#allocation7] sm:$0xff] %v347
    // Predicated region
    $region30: #{time_embedding.1} parent=1 // pred_check
      _
    $region31: #{time_embedding.1} parent=1 // pred_check_branch
      %352 = sbr.rel (0) target = $region33
    $region32: #{time_embedding.1} parent=1 // pred_region
      %s354 = ssub.s32 128, 128
      %355 = vsyncadd [#allocation4], %s354
      %s357 = sshll.u32 [#allocation7], 4
      %s358 = int_to_ptr.vmem [resolvable:$true] %s357
      %360 = dma.vmem_to_hbm [thread:$0]  %s358, 128, %s5, [#allocation4]
    $region33: #{time_embedding.1} parent=1 // pred_fallthru
      _
    // Predicated region
    $region34: #{time_embedding.1} parent=1 // pred_check
      _
    $region35: #{time_embedding.1} parent=1 // pred_check_branch
      %362 = sbr.rel (0) target = $region37
    $region36: #{time_embedding.1} parent=1 // pred_region
      %363 = dma.done [#allocation4], 128
    $region37: #{time_embedding.1} parent=1 // pred_fallthru
      _
    %364 = vsyncpa [#allocation3], 1
    %365 = vsyncpa [#allocation6], 1
    %366 = vsyncpa [#allocation4], 1

</llo_original>
